<compile_context>
chip_gen: v7x
topology: tpu7x:2x2x1
jax: 0.10.0
libtpu: 0.0.40
codegen_flags: <defaults>
</compile_context>

<pallas_src>
import functools
import math

import jax
import jax.numpy as jnp
from jax.experimental import pallas as pl
from jax.experimental.pallas import tpu as pltpu


def _arc_kernel(x_ref, w_ref, labels_ref, o_ref, *, s, cos_m, sin_m, th, mm, tn):
    """One grid step computes a (tb, tn) slab of output logits.

    x_ref      : (tb, D)  f32           batch tile of activations
    w_ref      : (tn, D)  f32/bf16      tn raw (un-normalized) weight rows
    labels_ref : (tb, 1)  i32           class labels for this batch tile
    o_ref      : (tb, tn) f32           output logits slab
    """
    j = pl.program_id(1)  # column-tile index

    # --- fused row-wise L2 normalization (matches F.normalize, eps=1e-12) ---
    w = w_ref[...].astype(jnp.float32)                       # (tn, D)
    norm = jnp.sqrt(jnp.sum(w * w, axis=1, keepdims=True))   # (tn, 1)
    inv = 1.0 / jnp.maximum(norm, 1e-12)
    w_n = w * inv                                            # normalized rows

    # cos(theta) = x @ W_norm^T  (contract over in_features of both operands)
    cos_th = jax.lax.dot_general(
        x_ref[...].astype(jnp.float32), w_n,
        dimension_numbers=(((1,), (1,)), ((), ())),
        preferred_element_type=jnp.float32,
    )
    cos_th = jnp.clip(cos_th, -1.0, 1.0)
    sin_th = jnp.sqrt(1.0 - cos_th * cos_th)
    cos_th_m = cos_th * cos_m - sin_th * sin_m
    # torch.where(cos_th > th, cos_th_m, cos_th - mm); the subsequent masked
    # assignment with cond = (cos_th - th <= 0) is equivalent to this where.
    cos_th_m = jnp.where(cos_th > th, cos_th_m, cos_th - mm)

    # one-hot(labels) blend restricted to this column slab -> single select
    col = jax.lax.broadcasted_iota(jnp.int32, cos_th.shape, 1) + j * tn
    out = jnp.where(col == labels_ref[...], cos_th_m, cos_th)  # (tb,1) bcast

    o_ref[...] = (out * s).astype(o_ref.dtype)


def _pick_batch_tile(B):
    if B <= 512:
        return B
    for tb in (512, 256, 128, 64, 32, 16, 8):
        if B % tb == 0:
            return tb
    return B


def _pick_col_tile(C, D, tb, w_itemsize, budget_bytes=20 << 20):
    """Largest column tile that divides C and keeps double-buffered tiles small."""
    for tn in (2048, 1024, 512, 256, 128):
        if C % tn != 0 or tn > C:
            continue
        resident = 2 * (tn * D * w_itemsize + tb * tn * 4) + 2 * (tb * D * 4 + tb * 4)
        if resident <= budget_bytes:
            return tn
    return C  # small / odd out_features: take the whole thing


def arc_module_forward(inputs, labels, weight, *, s=10.0, m=0.5,
                       weight_dtype=None):
    """Pallas implementation of ArcModule.forward.

    inputs : (B, in_features)  float32
    labels : (B,)              int32   (an out-of-range "ignore" label simply
                                        gets no margin applied)
    weight : (out_features, in_features) float32 (raw, un-normalized)
    returns: (B, out_features) float32
    """
    B, D = inputs.shape
    C, Dw = weight.shape
    assert D == Dw

    if weight_dtype is not None:
        weight = weight.astype(weight_dtype)  # e.g. bf16 to halve weight HBM bytes
    w_itemsize = weight.dtype.itemsize

    tb = _pick_batch_tile(B)
    tn = _pick_col_tile(C, D, tb, w_itemsize)
    assert B % tb == 0 and C % tn == 0

    cos_m = math.cos(m)
    sin_m = math.sin(m)
    th = math.cos(math.pi - m)
    mm = math.sin(math.pi - m) * m

    labels2d = labels.astype(jnp.int32).reshape(B, 1)

    kernel = functools.partial(
        _arc_kernel, s=float(s), cos_m=cos_m, sin_m=sin_m, th=th, mm=mm, tn=tn
    )

    # Resident VMEM estimate (double-buffered input/weight/output tiles).
    resident = 2 * (tn * D * w_itemsize + tb * tn * 4 + tb * D * 4 + tb * 4)
    vmem_limit = min(max(32 << 20, 2 * resident), 56 << 20)  # safe on v7x (64 MiB/TC)

    cost = pl.CostEstimate(
        flops=2 * B * C * D,
        transcendentals=B * C,
        bytes_accessed=C * D * w_itemsize + B * D * 4 + B * C * 4 + B * 4,
    )

    return pl.pallas_call(
        kernel,
        out_shape=jax.ShapeDtypeStruct((B, C), jnp.float32),
        grid=(B // tb, C // tn),
        in_specs=[
            pl.BlockSpec((tb, D), lambda i, j: (i, 0)),   # batch tile of activations
            pl.BlockSpec((tn, D), lambda i, j: (j, 0)),   # raw weight rows (normalized in-kernel)
            pl.BlockSpec((tb, 1), lambda i, j: (i, 0)),   # labels for this batch tile
        ],
        out_specs=pl.BlockSpec((tb, tn), lambda i, j: (i, j)),
        compiler_params=pltpu.CompilerParams(
            dimension_semantics=("parallel", "parallel"),
            vmem_limit_bytes=vmem_limit,
        ),
        cost_estimate=cost,
    )(inputs, weight, labels2d)


def arc_module_reference(inputs, labels, weight, *, s=10.0, m=0.5):
    """Pure-JAX reference matching the PyTorch forward."""
    cos_m = math.cos(m)
    sin_m = math.sin(m)
    th = math.cos(math.pi - m)
    mm = math.sin(math.pi - m) * m
    norm = jnp.sqrt(jnp.sum(weight * weight, axis=1, keepdims=True))
    wn = weight / jnp.maximum(norm, 1e-12)
    cos_th = jnp.clip(inputs @ wn.T, -1.0, 1.0)
    sin_th = jnp.sqrt(1.0 - cos_th ** 2)
    cos_th_m = cos_th * cos_m - sin_th * sin_m
    cos_th_m = jnp.where(cos_th > th, cos_th_m, cos_th - mm)
    onehot = jax.nn.one_hot(labels, weight.shape[0], dtype=jnp.float32)
    return (onehot * cos_th_m + (1.0 - onehot) * cos_th) * s


if __name__ == "__main__":
    B = 8            # batch
    IN_FEATURES = 32
    OUT_FEATURES = 256

    key = jax.random.PRNGKey(0)
    kx, kw, kl = jax.random.split(key, 3)

    # deterministic "xavier normal" init: std = sqrt(2 / (fan_in + fan_out))
    std = math.sqrt(2.0 / (IN_FEATURES + OUT_FEATURES))
    weight = std * jax.random.normal(kw, (OUT_FEATURES, IN_FEATURES), dtype=jnp.float32)

    inputs = jax.random.normal(kx, (B, IN_FEATURES), dtype=jnp.float32)
    labels = jax.random.randint(kl, (B,), 0, OUT_FEATURES, dtype=jnp.int32)

    out = arc_module_forward(inputs, labels, weight, s=10.0, m=0.5)
    out = jax.block_until_ready(out)

    ref = arc_module_reference(inputs, labels, weight, s=10.0, m=0.5)
    assert out.shape == (B, OUT_FEATURES)
    assert jnp.allclose(out, ref, atol=1e-4, rtol=1e-4), "mismatch vs reference"

    # Optional bf16-weight streaming path (looser tolerance: inputs quantized,
    # accumulation stays f32 via preferred_element_type).
    out_bf16 = jax.block_until_ready(
        arc_module_forward(inputs, labels, weight, s=10.0, m=0.5,
                           weight_dtype=jnp.bfloat16))
    assert jnp.allclose(out_bf16, ref, atol=5e-2, rtol=5e-2), "bf16 path mismatch"

    print("KERNEL_OK")
</pallas_src>

<mosaic_0001>
module attributes {stable_mosaic.version = 11 : i64} {
  func.func @_arc_kernel(%arg0: i32, %arg1: i32, %arg2: memref<8x32xf32, #tpu.memory_space<vmem>>, %arg3: memref<256x32xf32, #tpu.memory_space<vmem>>, %arg4: memref<8x1xi32, #tpu.memory_space<vmem>>, %arg5: memref<8x256xf32, #tpu.memory_space<vmem>>) attributes {dimension_semantics = [#tpu.dimension_semantics<parallel>, #tpu.dimension_semantics<parallel>], iteration_bounds = array<i64: 1, 1>, scalar_prefetch = 0 : i64, scratch_operands = 0 : i64, tpu.core_type = #tpu.core_type<tc>, window_params = [{transform_indices = @transform_0, window_bounds = array<i64: 8, 32>}, {transform_indices = @transform_1, window_bounds = array<i64: 256, 32>}, {transform_indices = @transform_2, window_bounds = array<i64: 8, 1>}, {transform_indices = @transform_3, window_bounds = array<i64: 8, 256>}]} {
    %c0 = arith.constant 0 : index
    %c0_0 = arith.constant 0 : index
    %0 = vector.load %arg3[%c0, %c0_0] : memref<256x32xf32, #tpu.memory_space<vmem>>, vector<256x32xf32>
    %1 = arith.mulf %0, %0 : vector<256x32xf32>
    %cst = arith.constant dense<0.000000e+00> : vector<256xf32>
    %2 = vector.multi_reduction <add>, %1, %cst [1] : vector<256x32xf32> to vector<256xf32>
    %3 = vector.shape_cast %2 : vector<256xf32> to vector<256x1xf32>
    %4 = math.sqrt %3 : vector<256x1xf32>
    %cst_1 = arith.constant 9.99999996E-13 : f32
    %5 = vector.broadcast %cst_1 : f32 to vector<256x1xf32>
    %6 = arith.maximumf %4, %5 : vector<256x1xf32>
    %cst_2 = arith.constant 1.000000e+00 : f32
    %7 = vector.broadcast %cst_2 : f32 to vector<256x1xf32>
    %8 = arith.divf %7, %6 : vector<256x1xf32>
    %9 = vector.broadcast %8 : vector<256x1xf32> to vector<256x32xf32>
    %10 = arith.mulf %0, %9 : vector<256x32xf32>
    %c0_3 = arith.constant 0 : index
    %c0_4 = arith.constant 0 : index
    %11 = vector.load %arg2[%c0_3, %c0_4] : memref<8x32xf32, #tpu.memory_space<vmem>>, vector<8x32xf32>
    %cst_5 = arith.constant dense<0.000000e+00> : vector<8x256xf32>
    %12 = tpu.matmul %11, %10, %cst_5 {dimension_numbers = #tpu.dot_dimension_numbers<[1], [1], [0], [0], [0, 0, 1, 0], [], []>} : vector<8x32xf32>, vector<256x32xf32>, vector<8x256xf32> -> vector<8x256xf32>
    %cst_6 = arith.constant -1.000000e+00 : f32
    %cst_7 = arith.constant 1.000000e+00 : f32
    %13 = vector.broadcast %cst_6 : f32 to vector<8x256xf32>
    %14 = arith.maximumf %13, %12 : vector<8x256xf32>
    %15 = vector.broadcast %cst_7 : f32 to vector<8x256xf32>
    %16 = arith.minimumf %15, %14 : vector<8x256xf32>
    %17 = arith.mulf %16, %16 : vector<8x256xf32>
    %cst_8 = arith.constant 1.000000e+00 : f32
    %18 = vector.broadcast %cst_8 : f32 to vector<8x256xf32>
    %19 = arith.subf %18, %17 : vector<8x256xf32>
    %20 = math.sqrt %19 : vector<8x256xf32>
    %cst_9 = arith.constant 0.87758255 : f32
    %21 = vector.broadcast %cst_9 : f32 to vector<8x256xf32>
    %22 = arith.mulf %16, %21 : vector<8x256xf32>
    %cst_10 = arith.constant 0.47942555 : f32
    %23 = vector.broadcast %cst_10 : f32 to vector<8x256xf32>
    %24 = arith.mulf %20, %23 : vector<8x256xf32>
    %25 = arith.subf %22, %24 : vector<8x256xf32>
    %cst_11 = arith.constant -0.87758255 : f32
    %26 = vector.broadcast %cst_11 : f32 to vector<8x256xf32>
    %27 = arith.cmpf ogt, %16, %26 : vector<8x256xf32>
    %cst_12 = arith.constant 0.239712775 : f32
    %28 = vector.broadcast %cst_12 : f32 to vector<8x256xf32>
    %29 = arith.subf %16, %28 : vector<8x256xf32>
    %30 = arith.select %27, %25, %29 : vector<8x256xi1>, vector<8x256xf32>
    %31 = tpu.iota {dimensions = array<i32: 1>} : vector<8x256xi32>
    %c256_i32 = arith.constant 256 : i32
    %32 = arith.muli %arg1, %c256_i32 : i32
    %33 = vector.broadcast %32 : i32 to vector<8x256xi32>
    %34 = arith.addi %31, %33 : vector<8x256xi32>
    %c0_13 = arith.constant 0 : index
    %c0_14 = arith.constant 0 : index
    %35 = vector.load %arg4[%c0_13, %c0_14] : memref<8x1xi32, #tpu.memory_space<vmem>>, vector<8x1xi32>
    %36 = vector.broadcast %35 : vector<8x1xi32> to vector<8x256xi32>
    %37 = arith.cmpi eq, %34, %36 : vector<8x256xi32>
    %38 = arith.select %37, %30, %16 : vector<8x256xi1>, vector<8x256xf32>
    %cst_15 = arith.constant 1.000000e+01 : f32
    %39 = vector.broadcast %cst_15 : f32 to vector<8x256xf32>
    %40 = arith.mulf %38, %39 : vector<8x256xf32>
    %c0_16 = arith.constant 0 : index
    %c0_17 = arith.constant 0 : index
    %41 = vector.load %arg5[%c0_16, %c0_17] : memref<8x256xf32, #tpu.memory_space<vmem>>, vector<8x256xf32>
    tpu.vector_store %arg5[%c0_16, %c0_17], %40 {strides = array<i32>} : memref<8x256xf32, #tpu.memory_space<vmem>>, vector<8x256xf32>,
    return
  }
  func.func @transform_0(%arg0: i32, %arg1: i32) -> (i32, i32) {
    %c0_i32 = arith.constant 0 : i32
    %c0_i32_0 = arith.constant 0 : i32
    return %arg0, %c0_i32 : i32, i32
  }
  func.func @transform_1(%arg0: i32, %arg1: i32) -> (i32, i32) {
    %c0_i32 = arith.constant 0 : i32
    %c0_i32_0 = arith.constant 0 : i32
    return %arg1, %c0_i32 : i32, i32
  }
  func.func @transform_2(%arg0: i32, %arg1: i32) -> (i32, i32) {
    %c0_i32 = arith.constant 0 : i32
    %c0_i32_0 = arith.constant 0 : i32
    return %arg0, %c0_i32 : i32, i32
  }
  func.func @transform_3(%arg0: i32, %arg1: i32) -> (i32, i32) {
    %c0_i32 = arith.constant 0 : i32
    return %arg0, %arg1 : i32, i32
  }
}

</mosaic_0001>

<llo_original>
// kernel: tpu_custom_call.1
$region0: #{tpu_custom_call.1}
  #allocation0 [shape = 'u32[]', space=smem, size = 0x4, offset = 0x4, fixed_abs, tag = 'smem constant byte address 0x4 - core index']
  #allocation1 [shape = 'u32[144,128]{1,0:T(1,128)}', space=vmem, size = 0x12000, scoped, tag = 'internal scratch']
  %s0 = inlined_call_operand.vmem [shape: f32[8,32], index: 0, kind: input, shape index: {}]
  %s1 = inlined_call_operand.vmem [shape: f32[256,32], index: 1, kind: input, shape index: {}]
  %s2 = inlined_call_operand.vmem [shape: s32[8,1], index: 2, kind: input, shape index: {}]
  %s3 = inlined_call_operand.hbm [shape: f32[8,256], index: 3, kind: output, shape index: {}]
  %s4 = sld [smem:[#allocation0]]
  $region22: #{tpu_custom_call.1} parent=0
    _
  %s6 = ssub.s32 1, %s4
  %s7 = scalar_select 0, %s6, %s4
  $region1: #{tpu_custom_call.1} parent=0
    #allocation2 [shape = 'u8[8192]{0}', space=vmem, size = 0x2000, scoped, tag = 'output window, operand 0, single buffered']
    #allocation3 [shape = 's32[1]{0}', space=sflag, size = 0x4, scoped, tag = 'scoped memory for tpu_custom_call.1']
    %8 = vsyncpa [#allocation3], 0
    // Predicated region
    $region2: #{tpu_custom_call.1} parent=1 // pred_check
      _
    $region3: #{tpu_custom_call.1} parent=1 // pred_check_branch
      %10 = sbr.rel (0) target = $region5
    $region4: #{tpu_custom_call.1} parent=1 // pred_region
      _
    $region5: #{tpu_custom_call.1} parent=1 // pred_fallthru
      _
    // Predicated region
    $region6: #{tpu_custom_call.1} parent=1 // pred_check
      _
    $region7: #{tpu_custom_call.1} parent=1 // pred_check_branch
      %12 = sbr.rel (0) target = $region9
    $region8: #{tpu_custom_call.1} parent=1 // pred_region
      _
    $region9: #{tpu_custom_call.1} parent=1 // pred_fallthru
      _
    // Predicated region
    $region10: #{tpu_custom_call.1} parent=1 // pred_check
      _
    $region11: #{tpu_custom_call.1} parent=1 // pred_check_branch
      %14 = sbr.rel (0) target = $region13
    $region12: #{tpu_custom_call.1} parent=1 // pred_region
      _
    $region13: #{tpu_custom_call.1} parent=1 // pred_fallthru
      _
    %v15 = vld [vmem:[%s1] sm:$0xff]
    %v16 = vld [vmem:[%s1 + $0x8] sm:$0xff]
    %v17 = vld [vmem:[%s1 + $0x10] sm:$0xff]
    %v18 = vld [vmem:[%s1 + $0x18] sm:$0xff]
    %v19 = vld [vmem:[%s1 + $0x20] sm:$0xff]
    %v20 = vld [vmem:[%s1 + $0x28] sm:$0xff]
    %v21 = vld [vmem:[%s1 + $0x30] sm:$0xff]
    %v22 = vld [vmem:[%s1 + $0x38] sm:$0xff]
    %v23 = vld [vmem:[%s1 + $0x40] sm:$0xff]
    %v24 = vld [vmem:[%s1 + $0x48] sm:$0xff]
    %v25 = vld [vmem:[%s1 + $0x50] sm:$0xff]
    %v26 = vld [vmem:[%s1 + $0x58] sm:$0xff]
    %v27 = vld [vmem:[%s1 + $0x60] sm:$0xff]
    %v28 = vld [vmem:[%s1 + $0x68] sm:$0xff]
    %v29 = vld [vmem:[%s1 + $0x70] sm:$0xff]
    %v30 = vld [vmem:[%s1 + $0x78] sm:$0xff]
    %v31 = vld [vmem:[%s1 + $0x80] sm:$0xff]
    %v32 = vld [vmem:[%s1 + $0x88] sm:$0xff]
    %v33 = vld [vmem:[%s1 + $0x90] sm:$0xff]
    %v34 = vld [vmem:[%s1 + $0x98] sm:$0xff]
    %v35 = vld [vmem:[%s1 + $0xa0] sm:$0xff]
    %v36 = vld [vmem:[%s1 + $0xa8] sm:$0xff]
    %v37 = vld [vmem:[%s1 + $0xb0] sm:$0xff]
    %v38 = vld [vmem:[%s1 + $0xb8] sm:$0xff]
    %v39 = vld [vmem:[%s1 + $0xc0] sm:$0xff]
    %v40 = vld [vmem:[%s1 + $0xc8] sm:$0xff]
    %v41 = vld [vmem:[%s1 + $0xd0] sm:$0xff]
    %v42 = vld [vmem:[%s1 + $0xd8] sm:$0xff]
    %v43 = vld [vmem:[%s1 + $0xe0] sm:$0xff]
    %v44 = vld [vmem:[%s1 + $0xe8] sm:$0xff]
    %v45 = vld [vmem:[%s1 + $0xf0] sm:$0xff]
    %v46 = vld [vmem:[%s1 + $0xf8] sm:$0xff]
    %v47 = vmul.f32 %v15, %v15
    %v48 = vmul.f32 %v16, %v16
    %v49 = vmul.f32 %v17, %v17
    %v50 = vmul.f32 %v18, %v18
    %v51 = vmul.f32 %v19, %v19
    %v52 = vmul.f32 %v20, %v20
    %v53 = vmul.f32 %v21, %v21
    %v54 = vmul.f32 %v22, %v22
    %v55 = vmul.f32 %v23, %v23
    %v56 = vmul.f32 %v24, %v24
    %v57 = vmul.f32 %v25, %v25
    %v58 = vmul.f32 %v26, %v26
    %v59 = vmul.f32 %v27, %v27
    %v60 = vmul.f32 %v28, %v28
    %v61 = vmul.f32 %v29, %v29
    %v62 = vmul.f32 %v30, %v30
    %v63 = vmul.f32 %v31, %v31
    %v64 = vmul.f32 %v32, %v32
    %v65 = vmul.f32 %v33, %v33
    %v66 = vmul.f32 %v34, %v34
    %v67 = vmul.f32 %v35, %v35
    %v68 = vmul.f32 %v36, %v36
    %v69 = vmul.f32 %v37, %v37
    %v70 = vmul.f32 %v38, %v38
    %v71 = vmul.f32 %v39, %v39
    %v72 = vmul.f32 %v40, %v40
    %v73 = vmul.f32 %v41, %v41
    %v74 = vmul.f32 %v42, %v42
    %v75 = vmul.f32 %v43, %v43
    %v76 = vmul.f32 %v44, %v44
    %v77 = vmul.f32 %v45, %v45
    %v78 = vmul.f32 %v46, %v46
    %vm79 = vcmask 261120
    %v80 = vsel %vm79, %v47, 0.0
    %81 = vadd.xlane.f32.xlu0 %v80
    %v82 = vpop.xlane.xlu0 %81
    %v83 = vsel %vm79, %v48, 0.0
    %84 = vadd.xlane.f32.xlu0 %v83
    %v85 = vpop.xlane.xlu0 %84
    %v86 = vsel %vm79, %v49, 0.0
    %87 = vadd.xlane.f32.xlu0 %v86
    %v88 = vpop.xlane.xlu0 %87
    %v89 = vsel %vm79, %v50, 0.0
    %90 = vadd.xlane.f32.xlu0 %v89
    %v91 = vpop.xlane.xlu0 %90
    %v92 = vsel %vm79, %v51, 0.0
    %93 = vadd.xlane.f32.xlu0 %v92
    %v94 = vpop.xlane.xlu0 %93
    %v95 = vsel %vm79, %v52, 0.0
    %96 = vadd.xlane.f32.xlu0 %v95
    %v97 = vpop.xlane.xlu0 %96
    %v98 = vsel %vm79, %v53, 0.0
    %99 = vadd.xlane.f32.xlu0 %v98
    %v100 = vpop.xlane.xlu0 %99
    %v101 = vsel %vm79, %v54, 0.0
    %102 = vadd.xlane.f32.xlu0 %v101
    %v103 = vpop.xlane.xlu0 %102
    %v104 = vsel %vm79, %v55, 0.0
    %105 = vadd.xlane.f32.xlu0 %v104
    %v106 = vpop.xlane.xlu0 %105
    %v107 = vsel %vm79, %v56, 0.0
    %108 = vadd.xlane.f32.xlu0 %v107
    %v109 = vpop.xlane.xlu0 %108
    %v110 = vsel %vm79, %v57, 0.0
    %111 = vadd.xlane.f32.xlu0 %v110
    %v112 = vpop.xlane.xlu0 %111
    %v113 = vsel %vm79, %v58, 0.0
    %114 = vadd.xlane.f32.xlu0 %v113
    %v115 = vpop.xlane.xlu0 %114
    %v116 = vsel %vm79, %v59, 0.0
    %117 = vadd.xlane.f32.xlu0 %v116
    %v118 = vpop.xlane.xlu0 %117
    %v119 = vsel %vm79, %v60, 0.0
    %120 = vadd.xlane.f32.xlu0 %v119
    %v121 = vpop.xlane.xlu0 %120
    %v122 = vsel %vm79, %v61, 0.0
    %123 = vadd.xlane.f32.xlu0 %v122
    %v124 = vpop.xlane.xlu0 %123
    %v125 = vsel %vm79, %v62, 0.0
    %126 = vadd.xlane.f32.xlu0 %v125
    %v127 = vpop.xlane.xlu0 %126
    %v128 = vsel %vm79, %v63, 0.0
    %129 = vadd.xlane.f32.xlu0 %v128
    %v130 = vpop.xlane.xlu0 %129
    %v131 = vsel %vm79, %v64, 0.0
    %132 = vadd.xlane.f32.xlu0 %v131
    %v133 = vpop.xlane.xlu0 %132
    %v134 = vsel %vm79, %v65, 0.0
    %135 = vadd.xlane.f32.xlu0 %v134
    %v136 = vpop.xlane.xlu0 %135
    %v137 = vsel %vm79, %v66, 0.0
    %138 = vadd.xlane.f32.xlu0 %v137
    %v139 = vpop.xlane.xlu0 %138
    %v140 = vsel %vm79, %v67, 0.0
    %141 = vadd.xlane.f32.xlu0 %v140
    %v142 = vpop.xlane.xlu0 %141
    %v143 = vsel %vm79, %v68, 0.0
    %144 = vadd.xlane.f32.xlu0 %v143
    %v145 = vpop.xlane.xlu0 %144
    %v146 = vsel %vm79, %v69, 0.0
    %147 = vadd.xlane.f32.xlu0 %v146
    %v148 = vpop.xlane.xlu0 %147
    %v149 = vsel %vm79, %v70, 0.0
    %150 = vadd.xlane.f32.xlu0 %v149
    %v151 = vpop.xlane.xlu0 %150
    %v152 = vsel %vm79, %v71, 0.0
    %153 = vadd.xlane.f32.xlu0 %v152
    %v154 = vpop.xlane.xlu0 %153
    %v155 = vsel %vm79, %v72, 0.0
    %156 = vadd.xlane.f32.xlu0 %v155
    %v157 = vpop.xlane.xlu0 %156
    %v158 = vsel %vm79, %v73, 0.0
    %159 = vadd.xlane.f32.xlu0 %v158
    %v160 = vpop.xlane.xlu0 %159
    %v161 = vsel %vm79, %v74, 0.0
    %162 = vadd.xlane.f32.xlu0 %v161
    %v163 = vpop.xlane.xlu0 %162
    %v164 = vsel %vm79, %v75, 0.0
    %165 = vadd.xlane.f32.xlu0 %v164
    %v166 = vpop.xlane.xlu0 %165
    %v167 = vsel %vm79, %v76, 0.0
    %168 = vadd.xlane.f32.xlu0 %v167
    %v169 = vpop.xlane.xlu0 %168
    %v170 = vsel %vm79, %v77, 0.0
    %171 = vadd.xlane.f32.xlu0 %v170
    %v172 = vpop.xlane.xlu0 %171
    %v173 = vsel %vm79, %v78, 0.0
    %174 = vadd.xlane.f32.xlu0 %v173
    %v175 = vpop.xlane.xlu0 %174
    %v176 = vrsqrt.pop %v82
    %v177 = vmul.f32 %v82, %v176
    %vm178 = vcmp.eq.f32.partialorder %v82, inf
    %v179 = vsel %vm178, %v82, %v177
    %vm180 = vcmp.eq.f32.partialorder %v82, 0.0
    %v181 = vand.u32 %v82, 2147483648
    %v182 = vsel %vm180, %v181, %v179
    %v183 = vrsqrt.pop %v85
    %v184 = vmul.f32 %v85, %v183
    %vm185 = vcmp.eq.f32.partialorder %v85, inf
    %v186 = vsel %vm185, %v85, %v184
    %vm187 = vcmp.eq.f32.partialorder %v85, 0.0
    %v188 = vand.u32 %v85, 2147483648
    %v189 = vsel %vm187, %v188, %v186
    %v190 = vrsqrt.pop %v88
    %v191 = vmul.f32 %v88, %v190
    %vm192 = vcmp.eq.f32.partialorder %v88, inf
    %v193 = vsel %vm192, %v88, %v191
    %vm194 = vcmp.eq.f32.partialorder %v88, 0.0
    %v195 = vand.u32 %v88, 2147483648
    %v196 = vsel %vm194, %v195, %v193
    %v197 = vrsqrt.pop %v91
    %v198 = vmul.f32 %v91, %v197
    %vm199 = vcmp.eq.f32.partialorder %v91, inf
    %v200 = vsel %vm199, %v91, %v198
    %vm201 = vcmp.eq.f32.partialorder %v91, 0.0
    %v202 = vand.u32 %v91, 2147483648
    %v203 = vsel %vm201, %v202, %v200
    %v204 = vrsqrt.pop %v94
    %v205 = vmul.f32 %v94, %v204
    %vm206 = vcmp.eq.f32.partialorder %v94, inf
    %v207 = vsel %vm206, %v94, %v205
    %vm208 = vcmp.eq.f32.partialorder %v94, 0.0
    %v209 = vand.u32 %v94, 2147483648
    %v210 = vsel %vm208, %v209, %v207
    %v211 = vrsqrt.pop %v97
    %v212 = vmul.f32 %v97, %v211
    %vm213 = vcmp.eq.f32.partialorder %v97, inf
    %v214 = vsel %vm213, %v97, %v212
    %vm215 = vcmp.eq.f32.partialorder %v97, 0.0
    %v216 = vand.u32 %v97, 2147483648
    %v217 = vsel %vm215, %v216, %v214
    %v218 = vrsqrt.pop %v100
    %v219 = vmul.f32 %v100, %v218
    %vm220 = vcmp.eq.f32.partialorder %v100, inf
    %v221 = vsel %vm220, %v100, %v219
    %vm222 = vcmp.eq.f32.partialorder %v100, 0.0
    %v223 = vand.u32 %v100, 2147483648
    %v224 = vsel %vm222, %v223, %v221
    %v225 = vrsqrt.pop %v103
    %v226 = vmul.f32 %v103, %v225
    %vm227 = vcmp.eq.f32.partialorder %v103, inf
    %v228 = vsel %vm227, %v103, %v226
    %vm229 = vcmp.eq.f32.partialorder %v103, 0.0
    %v230 = vand.u32 %v103, 2147483648
    %v231 = vsel %vm229, %v230, %v228
    %v232 = vrsqrt.pop %v106
    %v233 = vmul.f32 %v106, %v232
    %vm234 = vcmp.eq.f32.partialorder %v106, inf
    %v235 = vsel %vm234, %v106, %v233
    %vm236 = vcmp.eq.f32.partialorder %v106, 0.0
    %v237 = vand.u32 %v106, 2147483648
    %v238 = vsel %vm236, %v237, %v235
    %v239 = vrsqrt.pop %v109
    %v240 = vmul.f32 %v109, %v239
    %vm241 = vcmp.eq.f32.partialorder %v109, inf
    %v242 = vsel %vm241, %v109, %v240
    %vm243 = vcmp.eq.f32.partialorder %v109, 0.0
    %v244 = vand.u32 %v109, 2147483648
    %v245 = vsel %vm243, %v244, %v242
    %v246 = vrsqrt.pop %v112
    %v247 = vmul.f32 %v112, %v246
    %vm248 = vcmp.eq.f32.partialorder %v112, inf
    %v249 = vsel %vm248, %v112, %v247
    %vm250 = vcmp.eq.f32.partialorder %v112, 0.0
    %v251 = vand.u32 %v112, 2147483648
    %v252 = vsel %vm250, %v251, %v249
    %v253 = vrsqrt.pop %v115
    %v254 = vmul.f32 %v115, %v253
    %vm255 = vcmp.eq.f32.partialorder %v115, inf
    %v256 = vsel %vm255, %v115, %v254
    %vm257 = vcmp.eq.f32.partialorder %v115, 0.0
    %v258 = vand.u32 %v115, 2147483648
    %v259 = vsel %vm257, %v258, %v256
    %v260 = vrsqrt.pop %v118
    %v261 = vmul.f32 %v118, %v260
    %vm262 = vcmp.eq.f32.partialorder %v118, inf
    %v263 = vsel %vm262, %v118, %v261
    %vm264 = vcmp.eq.f32.partialorder %v118, 0.0
    %v265 = vand.u32 %v118, 2147483648
    %v266 = vsel %vm264, %v265, %v263
    %v267 = vrsqrt.pop %v121
    %v268 = vmul.f32 %v121, %v267
    %vm269 = vcmp.eq.f32.partialorder %v121, inf
    %v270 = vsel %vm269, %v121, %v268
    %vm271 = vcmp.eq.f32.partialorder %v121, 0.0
    %v272 = vand.u32 %v121, 2147483648
    %v273 = vsel %vm271, %v272, %v270
    %v274 = vrsqrt.pop %v124
    %v275 = vmul.f32 %v124, %v274
    %vm276 = vcmp.eq.f32.partialorder %v124, inf
    %v277 = vsel %vm276, %v124, %v275
    %vm278 = vcmp.eq.f32.partialorder %v124, 0.0
    %v279 = vand.u32 %v124, 2147483648
    %v280 = vsel %vm278, %v279, %v277
    %v281 = vrsqrt.pop %v127
    %v282 = vmul.f32 %v127, %v281
    %vm283 = vcmp.eq.f32.partialorder %v127, inf
    %v284 = vsel %vm283, %v127, %v282
    %vm285 = vcmp.eq.f32.partialorder %v127, 0.0
    %v286 = vand.u32 %v127, 2147483648
    %v287 = vsel %vm285, %v286, %v284
    %v288 = vrsqrt.pop %v130
    %v289 = vmul.f32 %v130, %v288
    %vm290 = vcmp.eq.f32.partialorder %v130, inf
    %v291 = vsel %vm290, %v130, %v289
    %vm292 = vcmp.eq.f32.partialorder %v130, 0.0
    %v293 = vand.u32 %v130, 2147483648
    %v294 = vsel %vm292, %v293, %v291
    %v295 = vrsqrt.pop %v133
    %v296 = vmul.f32 %v133, %v295
    %vm297 = vcmp.eq.f32.partialorder %v133, inf
    %v298 = vsel %vm297, %v133, %v296
    %vm299 = vcmp.eq.f32.partialorder %v133, 0.0
    %v300 = vand.u32 %v133, 2147483648
    %v301 = vsel %vm299, %v300, %v298
    %v302 = vrsqrt.pop %v136
    %v303 = vmul.f32 %v136, %v302
    %vm304 = vcmp.eq.f32.partialorder %v136, inf
    %v305 = vsel %vm304, %v136, %v303
    %vm306 = vcmp.eq.f32.partialorder %v136, 0.0
    %v307 = vand.u32 %v136, 2147483648
    %v308 = vsel %vm306, %v307, %v305
    %v309 = vrsqrt.pop %v139
    %v310 = vmul.f32 %v139, %v309
    %vm311 = vcmp.eq.f32.partialorder %v139, inf
    %v312 = vsel %vm311, %v139, %v310
    %vm313 = vcmp.eq.f32.partialorder %v139, 0.0
    %v314 = vand.u32 %v139, 2147483648
    %v315 = vsel %vm313, %v314, %v312
    %v316 = vrsqrt.pop %v142
    %v317 = vmul.f32 %v142, %v316
    %vm318 = vcmp.eq.f32.partialorder %v142, inf
    %v319 = vsel %vm318, %v142, %v317
    %vm320 = vcmp.eq.f32.partialorder %v142, 0.0
    %v321 = vand.u32 %v142, 2147483648
    %v322 = vsel %vm320, %v321, %v319
    %v323 = vrsqrt.pop %v145
    %v324 = vmul.f32 %v145, %v323
    %vm325 = vcmp.eq.f32.partialorder %v145, inf
    %v326 = vsel %vm325, %v145, %v324
    %vm327 = vcmp.eq.f32.partialorder %v145, 0.0
    %v328 = vand.u32 %v145, 2147483648
    %v329 = vsel %vm327, %v328, %v326
    %v330 = vrsqrt.pop %v148
    %v331 = vmul.f32 %v148, %v330
    %vm332 = vcmp.eq.f32.partialorder %v148, inf
    %v333 = vsel %vm332, %v148, %v331
    %vm334 = vcmp.eq.f32.partialorder %v148, 0.0
    %v335 = vand.u32 %v148, 2147483648
    %v336 = vsel %vm334, %v335, %v333
    %v337 = vrsqrt.pop %v151
    %v338 = vmul.f32 %v151, %v337
    %vm339 = vcmp.eq.f32.partialorder %v151, inf
    %v340 = vsel %vm339, %v151, %v338
    %vm341 = vcmp.eq.f32.partialorder %v151, 0.0
    %v342 = vand.u32 %v151, 2147483648
    %v343 = vsel %vm341, %v342, %v340
    %v344 = vrsqrt.pop %v154
    %v345 = vmul.f32 %v154, %v344
    %vm346 = vcmp.eq.f32.partialorder %v154, inf
    %v347 = vsel %vm346, %v154, %v345
    %vm348 = vcmp.eq.f32.partialorder %v154, 0.0
    %v349 = vand.u32 %v154, 2147483648
    %v350 = vsel %vm348, %v349, %v347
    %v351 = vrsqrt.pop %v157
    %v352 = vmul.f32 %v157, %v351
    %vm353 = vcmp.eq.f32.partialorder %v157, inf
    %v354 = vsel %vm353, %v157, %v352
    %vm355 = vcmp.eq.f32.partialorder %v157, 0.0
    %v356 = vand.u32 %v157, 2147483648
    %v357 = vsel %vm355, %v356, %v354
    %v358 = vrsqrt.pop %v160
    %v359 = vmul.f32 %v160, %v358
    %vm360 = vcmp.eq.f32.partialorder %v160, inf
    %v361 = vsel %vm360, %v160, %v359
    %vm362 = vcmp.eq.f32.partialorder %v160, 0.0
    %v363 = vand.u32 %v160, 2147483648
    %v364 = vsel %vm362, %v363, %v361
    %v365 = vrsqrt.pop %v163
    %v366 = vmul.f32 %v163, %v365
    %vm367 = vcmp.eq.f32.partialorder %v163, inf
    %v368 = vsel %vm367, %v163, %v366
    %vm369 = vcmp.eq.f32.partialorder %v163, 0.0
    %v370 = vand.u32 %v163, 2147483648
    %v371 = vsel %vm369, %v370, %v368
    %v372 = vrsqrt.pop %v166
    %v373 = vmul.f32 %v166, %v372
    %vm374 = vcmp.eq.f32.partialorder %v166, inf
    %v375 = vsel %vm374, %v166, %v373
    %vm376 = vcmp.eq.f32.partialorder %v166, 0.0
    %v377 = vand.u32 %v166, 2147483648
    %v378 = vsel %vm376, %v377, %v375
    %v379 = vrsqrt.pop %v169
    %v380 = vmul.f32 %v169, %v379
    %vm381 = vcmp.eq.f32.partialorder %v169, inf
    %v382 = vsel %vm381, %v169, %v380
    %vm383 = vcmp.eq.f32.partialorder %v169, 0.0
    %v384 = vand.u32 %v169, 2147483648
    %v385 = vsel %vm383, %v384, %v382
    %v386 = vrsqrt.pop %v172
    %v387 = vmul.f32 %v172, %v386
    %vm388 = vcmp.eq.f32.partialorder %v172, inf
    %v389 = vsel %vm388, %v172, %v387
    %vm390 = vcmp.eq.f32.partialorder %v172, 0.0
    %v391 = vand.u32 %v172, 2147483648
    %v392 = vsel %vm390, %v391, %v389
    %v393 = vrsqrt.pop %v175
    %v394 = vmul.f32 %v175, %v393
    %vm395 = vcmp.eq.f32.partialorder %v175, inf
    %v396 = vsel %vm395, %v175, %v394
    %vm397 = vcmp.eq.f32.partialorder %v175, 0.0
    %v398 = vand.u32 %v175, 2147483648
    %v399 = vsel %vm397, %v398, %v396
    %v400 = vmax.f32 %v182, 1e-12
    %v401 = vmax.f32 %v189, 1e-12
    %v402 = vmax.f32 %v196, 1e-12
    %v403 = vmax.f32 %v203, 1e-12
    %v404 = vmax.f32 %v210, 1e-12
    %v405 = vmax.f32 %v217, 1e-12
    %v406 = vmax.f32 %v224, 1e-12
    %v407 = vmax.f32 %v231, 1e-12
    %v408 = vmax.f32 %v238, 1e-12
    %v409 = vmax.f32 %v245, 1e-12
    %v410 = vmax.f32 %v252, 1e-12
    %v411 = vmax.f32 %v259, 1e-12
    %v412 = vmax.f32 %v266, 1e-12
    %v413 = vmax.f32 %v273, 1e-12
    %v414 = vmax.f32 %v280, 1e-12
    %v415 = vmax.f32 %v287, 1e-12
    %v416 = vmax.f32 %v294, 1e-12
    %v417 = vmax.f32 %v301, 1e-12
    %v418 = vmax.f32 %v308, 1e-12
    %v419 = vmax.f32 %v315, 1e-12
    %v420 = vmax.f32 %v322, 1e-12
    %v421 = vmax.f32 %v329, 1e-12
    %v422 = vmax.f32 %v336, 1e-12
    %v423 = vmax.f32 %v343, 1e-12
    %v424 = vmax.f32 %v350, 1e-12
    %v425 = vmax.f32 %v357, 1e-12
    %v426 = vmax.f32 %v364, 1e-12
    %v427 = vmax.f32 %v371, 1e-12
    %v428 = vmax.f32 %v378, 1e-12
    %v429 = vmax.f32 %v385, 1e-12
    %v430 = vmax.f32 %v392, 1e-12
    %v431 = vmax.f32 %v399, 1e-12
    %v432 = vrcp.pop %v400
    %v433 = vmul.f32 1.0, %v432
    %v434 = vrcp.pop %v401
    %v435 = vmul.f32 1.0, %v434
    %v436 = vrcp.pop %v402
    %v437 = vmul.f32 1.0, %v436
    %v438 = vrcp.pop %v403
    %v439 = vmul.f32 1.0, %v438
    %v440 = vrcp.pop %v404
    %v441 = vmul.f32 1.0, %v440
    %v442 = vrcp.pop %v405
    %v443 = vmul.f32 1.0, %v442
    %v444 = vrcp.pop %v406
    %v445 = vmul.f32 1.0, %v444
    %v446 = vrcp.pop %v407
    %v447 = vmul.f32 1.0, %v446
    %v448 = vrcp.pop %v408
    %v449 = vmul.f32 1.0, %v448
    %v450 = vrcp.pop %v409
    %v451 = vmul.f32 1.0, %v450
    %v452 = vrcp.pop %v410
    %v453 = vmul.f32 1.0, %v452
    %v454 = vrcp.pop %v411
    %v455 = vmul.f32 1.0, %v454
    %v456 = vrcp.pop %v412
    %v457 = vmul.f32 1.0, %v456
    %v458 = vrcp.pop %v413
    %v459 = vmul.f32 1.0, %v458
    %v460 = vrcp.pop %v414
    %v461 = vmul.f32 1.0, %v460
    %v462 = vrcp.pop %v415
    %v463 = vmul.f32 1.0, %v462
    %v464 = vrcp.pop %v416
    %v465 = vmul.f32 1.0, %v464
    %v466 = vrcp.pop %v417
    %v467 = vmul.f32 1.0, %v466
    %v468 = vrcp.pop %v418
    %v469 = vmul.f32 1.0, %v468
    %v470 = vrcp.pop %v419
    %v471 = vmul.f32 1.0, %v470
    %v472 = vrcp.pop %v420
    %v473 = vmul.f32 1.0, %v472
    %v474 = vrcp.pop %v421
    %v475 = vmul.f32 1.0, %v474
    %v476 = vrcp.pop %v422
    %v477 = vmul.f32 1.0, %v476
    %v478 = vrcp.pop %v423
    %v479 = vmul.f32 1.0, %v478
    %v480 = vrcp.pop %v424
    %v481 = vmul.f32 1.0, %v480
    %v482 = vrcp.pop %v425
    %v483 = vmul.f32 1.0, %v482
    %v484 = vrcp.pop %v426
    %v485 = vmul.f32 1.0, %v484
    %v486 = vrcp.pop %v427
    %v487 = vmul.f32 1.0, %v486
    %v488 = vrcp.pop %v428
    %v489 = vmul.f32 1.0, %v488
    %v490 = vrcp.pop %v429
    %v491 = vmul.f32 1.0, %v490
    %v492 = vrcp.pop %v430
    %v493 = vmul.f32 1.0, %v492
    %v494 = vrcp.pop %v431
    %v495 = vmul.f32 1.0, %v494
    %v496 = vmul.f32 %v15, %v433
    %v497 = vmul.f32 %v16, %v435
    %v498 = vmul.f32 %v17, %v437
    %v499 = vmul.f32 %v18, %v439
    %v500 = vmul.f32 %v19, %v441
    %v501 = vmul.f32 %v20, %v443
    %v502 = vmul.f32 %v21, %v445
    %v503 = vmul.f32 %v22, %v447
    %v504 = vmul.f32 %v23, %v449
    %v505 = vmul.f32 %v24, %v451
    %v506 = vmul.f32 %v25, %v453
    %v507 = vmul.f32 %v26, %v455
    %v508 = vmul.f32 %v27, %v457
    %v509 = vmul.f32 %v28, %v459
    %v510 = vmul.f32 %v29, %v461
    %v511 = vmul.f32 %v30, %v463
    %v512 = vmul.f32 %v31, %v465
    %v513 = vmul.f32 %v32, %v467
    %v514 = vmul.f32 %v33, %v469
    %v515 = vmul.f32 %v34, %v471
    %v516 = vmul.f32 %v35, %v473
    %v517 = vmul.f32 %v36, %v475
    %v518 = vmul.f32 %v37, %v477
    %v519 = vmul.f32 %v38, %v479
    %v520 = vmul.f32 %v39, %v481
    %v521 = vmul.f32 %v40, %v483
    %v522 = vmul.f32 %v41, %v485
    %v523 = vmul.f32 %v42, %v487
    %v524 = vmul.f32 %v43, %v489
    %v525 = vmul.f32 %v44, %v491
    %v526 = vmul.f32 %v45, %v493
    %v527 = vmul.f32 %v46, %v495
    %v528 = vld [vmem:[%s0] sm:$0xff]
    %v530 = vsel %vm79, %v528, 0
    %v533 = vsel %vm79, %v496, 0
    %v536 = vsel %vm79, %v497, 0
    %v539 = vsel %vm79, %v498, 0
    %v542 = vsel %vm79, %v499, 0
    %v545 = vsel %vm79, %v500, 0
    %v548 = vsel %vm79, %v501, 0
    %v551 = vsel %vm79, %v502, 0
    %v554 = vsel %vm79, %v503, 0
    %v557 = vsel %vm79, %v504, 0
    %v560 = vsel %vm79, %v505, 0
    %v563 = vsel %vm79, %v506, 0
    %v566 = vsel %vm79, %v507, 0
    %v569 = vsel %vm79, %v508, 0
    %v572 = vsel %vm79, %v509, 0
    %v575 = vsel %vm79, %v510, 0
    %v578 = vsel %vm79, %v511, 0
    %v581 = vsel %vm79, %v512, 0
    %v584 = vsel %vm79, %v513, 0
    %v587 = vsel %vm79, %v514, 0
    %v590 = vsel %vm79, %v515, 0
    %v593 = vsel %vm79, %v516, 0
    %v596 = vsel %vm79, %v517, 0
    %v599 = vsel %vm79, %v518, 0
    %v602 = vsel %vm79, %v519, 0
    %v605 = vsel %vm79, %v520, 0
    %v608 = vsel %vm79, %v521, 0
    %v611 = vsel %vm79, %v522, 0
    %v614 = vsel %vm79, %v523, 0
    %v617 = vsel %vm79, %v524, 0
    %v620 = vsel %vm79, %v525, 0
    %v623 = vsel %vm79, %v526, 0
    %v626 = vsel %vm79, %v527, 0
    %628 = vmatprep.subr.mxu0 0.0
    %629 = vmatpush1.xpose.msra.mxu0 %v533
    %630 = vmatprep.subr.mxu0 0.0
    %631 = vmatpush1.xpose.msra.mxu0 %v536
    %632 = vmatprep.subr.mxu0 0.0
    %633 = vmatpush1.xpose.msra.mxu0 %v539
    %634 = vmatprep.subr.mxu0 0.0
    %635 = vmatpush1.xpose.msra.mxu0 %v542
    %636 = vmatprep.subr.mxu0 0.0
    %637 = vmatpush1.xpose.msra.mxu0 %v545
    %638 = vmatprep.subr.mxu0 0.0
    %639 = vmatpush1.xpose.msra.mxu0 %v548
    %640 = vmatprep.subr.mxu0 0.0
    %641 = vmatpush1.xpose.msra.mxu0 %v551
    %642 = vmatprep.subr.mxu0 0.0
    %643 = vmatpush1.xpose.msra.mxu0 %v554
    %644 = vmatprep.subr.mxu0 0.0
    %645 = vmatpush1.xpose.msra.mxu0 %v557
    %646 = vmatprep.subr.mxu0 0.0
    %647 = vmatpush1.xpose.msra.mxu0 %v560
    %648 = vmatprep.subr.mxu0 0.0
    %649 = vmatpush1.xpose.msra.mxu0 %v563
    %650 = vmatprep.subr.mxu0 0.0
    %651 = vmatpush1.xpose.msra.mxu0 %v566
    %652 = vmatprep.subr.mxu0 0.0
    %653 = vmatpush1.xpose.msra.mxu0 %v569
    %654 = vmatprep.subr.mxu0 0.0
    %655 = vmatpush1.xpose.msra.mxu0 %v572
    %656 = vmatprep.subr.mxu0 0.0
    %657 = vmatpush1.xpose.msra.mxu0 %v575
    %658 = vmatprep.subr.mxu0 0.0
    %659 = vmatpush1.xpose.msra.mxu0 %v578
    %660 = vmatprep.subr.mxu0 0.0
    %661 = vmatpush1.xpose.msra.mxu0 %v581
    %662 = vmatprep.subr.mxu0 0.0
    %663 = vmatpush1.xpose.msra.mxu0 %v584
    %664 = vmatprep.subr.mxu0 0.0
    %665 = vmatpush1.xpose.msra.mxu0 %v587
    %666 = vmatprep.subr.mxu0 0.0
    %667 = vmatpush1.xpose.msra.mxu0 %v590
    %668 = vmatprep.subr.mxu0 0.0
    %669 = vmatpush1.xpose.msra.mxu0 %v593
    %670 = vmatprep.subr.mxu0 0.0
    %671 = vmatpush1.xpose.msra.mxu0 %v596
    %672 = vmatprep.subr.mxu0 0.0
    %673 = vmatpush1.xpose.msra.mxu0 %v599
    %674 = vmatprep.subr.mxu0 0.0
    %675 = vmatpush1.xpose.msra.mxu0 %v602
    %676 = vmatprep.subr.mxu0 0.0
    %677 = vmatpush1.xpose.msra.mxu0 %v605
    %678 = vmatprep.subr.mxu0 0.0
    %679 = vmatpush1.xpose.msra.mxu0 %v608
    %680 = vmatprep.subr.mxu0 0.0
    %681 = vmatpush1.xpose.msra.mxu0 %v611
    %682 = vmatprep.subr.mxu0 0.0
    %683 = vmatpush1.xpose.msra.mxu0 %v614
    %684 = vmatprep.subr.mxu0 0.0
    %685 = vmatpush1.xpose.msra.mxu0 %v617
    %686 = vmatprep.subr.mxu0 0.0
    %687 = vmatpush1.xpose.msra.mxu0 %v620
    %688 = vmatprep.subr.mxu0 0.0
    %689 = vmatpush1.xpose.msra.mxu0 %v623
    %690 = vmatprep.subr.mxu0 0.0
    %691 = vmatpush1.xpose.msra.mxu0 %v626
    %692 = vmatprep.mubr.f32.mxu0 0.0
    %693 = vmatmul.mubr.f32.gmra.mrb[0].mxu0 %v530
    %v694 = vpop.f32.mrb[0].mxu0
    %v695 = vadd.f32 0.0, %v694
    %v696 = vpop.f32.mrb[0].mxu0
    %v697 = vadd.f32 0.0, %v696
    %698 = vdwg.mxu0
    %v699 = vmax.f32 %v695, -1.0
    %v700 = vmax.f32 %v697, -1.0
    %v701 = vmin.f32 %v699, 1.0
    %v702 = vmin.f32 %v700, 1.0
    %v703 = vmul.f32 %v701, %v701
    %v704 = vmul.f32 %v702, %v702
    %v705 = vsub.f32 1.0, %v703
    %v706 = vsub.f32 1.0, %v704
    %v707 = vrsqrt.pop %v705
    %v708 = vmul.f32 %v705, %v707
    %vm709 = vcmp.eq.f32.partialorder %v705, inf
    %v710 = vsel %vm709, %v705, %v708
    %vm711 = vcmp.eq.f32.partialorder %v705, 0.0
    %v712 = vand.u32 %v705, 2147483648
    %v713 = vsel %vm711, %v712, %v710
    %v714 = vrsqrt.pop %v706
    %v715 = vmul.f32 %v706, %v714
    %vm716 = vcmp.eq.f32.partialorder %v706, inf
    %v717 = vsel %vm716, %v706, %v715
    %vm718 = vcmp.eq.f32.partialorder %v706, 0.0
    %v719 = vand.u32 %v706, 2147483648
    %v720 = vsel %vm718, %v719, %v717
    %v721 = vmul.f32 %v701, 0.87758255
    %v722 = vmul.f32 %v702, 0.87758255
    %v723 = vmul.f32 %v713, 0.47942555
    %v724 = vmul.f32 %v720, 0.47942555
    %v725 = vsub.f32 %v721, %v723
    %v726 = vsub.f32 %v722, %v724
    %vm727 = vcmp.gt.f32.partialorder %v701, -0.87758255
    %vm728 = vcmp.gt.f32.partialorder %v702, -0.87758255
    %v729 = vsub.f32 %v701, 0.23971277
    %v730 = vsub.f32 %v702, 0.23971277
    %v731 = vsel %vm727, %v725, %v729
    %v732 = vsel %vm728, %v726, %v730
    %v733 = vlaneseq
    %v734 = vand.u32 %v733, 127
    %v735 = vadd.s32 %v734, 128
    %s736 = smul.u32 0, 256
    %v737 = vstv %s736
    %v738 = vadd.s32 %v734, %v737
    %v739 = vadd.s32 %v735, %v737
    %v740 = vld [vmem:[%s2] sm:$0xff]
    %741 = vset.pattern.permute.xlu0 0
    %742 = vperm.xlu0 %741, %v740
    %v743 = vpop.permute.xlu0 %742
    %vm744 = vcmp.eq.s32.totalorder %v738, %v743
    %vm745 = vcmp.eq.s32.totalorder %v739, %v743
    %v746 = vsel %vm744, %v731, %v701
    %v747 = vsel %vm745, %v732, %v702
    %v748 = vmul.f32 %v746, 10.0
    %v749 = vmul.f32 %v747, 10.0
    %750 = vst [vmem:[#allocation2] sm:$0xff] %v748
    %751 = vst [vmem:[#allocation2 + $0x8] sm:$0xff] %v749
    // Predicated region
    $region14: #{tpu_custom_call.1} parent=1 // pred_check
      _
    $region15: #{tpu_custom_call.1} parent=1 // pred_check_branch
      %753 = sbr.rel (0) target = $region17
    $region16: #{tpu_custom_call.1} parent=1 // pred_region
      %s755 = ssub.s32 256, 256
      %756 = vsyncadd [#allocation3], %s755
      %s758 = sshll.u32 [#allocation2], 4
      %s759 = int_to_ptr.vmem [resolvable:$true] %s758
      %761 = dma.vmem_to_hbm [thread:$0]  %s759, 256, %s3, [#allocation3]
    $region17: #{tpu_custom_call.1} parent=1 // pred_fallthru
      _
    // Predicated region
    $region18: #{tpu_custom_call.1} parent=1 // pred_check
      _
    $region19: #{tpu_custom_call.1} parent=1 // pred_check_branch
      %763 = sbr.rel (0) target = $region21
    $region20: #{tpu_custom_call.1} parent=1 // pred_region
      %764 = dma.done [#allocation3], 256
    $region21: #{tpu_custom_call.1} parent=1 // pred_fallthru
      _
    %765 = vsyncpa [#allocation3], 1

</llo_original>
